<compile_context>
chip_gen: v5e
topology: v5e:2x2
jax: 0.10.0
libtpu: 0.0.40
codegen_flags: <defaults>
</compile_context>

<pallas_src>
import functools

import jax
import jax.numpy as jnp
from jax.experimental import pallas as pl
from jax.experimental.pallas import tpu as pltpu

LANE = 128
SUBLANE = 8


def _round_up(x, m):
    return ((x + m - 1) // m) * m


def _policy_kernel(state_ref, w_bd_ref, b123_ref, w4_ref, b4_ref, out_ref, *, h_pad):
    x = state_ref[...]                                   # (tb, k_pad), lane-dense

    # One block-diagonal matmul computes all three branch pre-activations:
    #   z[:, 0:h] = s1@w1,  z[:, h:2h] = s2@w2,  z[:, 2h:3h] = s3@w3
    z = jnp.dot(x, w_bd_ref[...], preferred_element_type=jnp.float32) + b123_ref[...]

    z1 = z[:, 0 * h_pad:1 * h_pad]                       # 128-aligned slices: free
    z2 = z[:, 1 * h_pad:2 * h_pad]
    z3 = z[:, 2 * h_pad:3 * h_pad]

    # sigmoid(z) == 0.5*(tanh(0.5*z)+1): 1 EUP op/elem instead of exp + reciprocal.
    h_u_init = 0.5 * (jnp.tanh(0.5 * z1) + 1.0)
    h_u_cand = jnp.tanh(z2)
    h_s_gate = 0.5 * (jnp.tanh(0.5 * z3) + 1.0)

    # Algebraically equal to h_u_init*h_u_cand - h_s_gate*h_u_cand (saves one VPU mul).
    gated = (h_u_init - h_s_gate) * h_u_cand             # (tb, h_pad)

    # Output head: (tb, h_pad) @ (h_pad, a_pad) -> lane-dense store.
    out_ref[...] = jnp.tanh(
        jnp.dot(gated, w4_ref[...], preferred_element_type=jnp.float32) + b4_ref[...])


def pack_params(params, num_inputs):
    """Build the block-diagonal first-layer weight; pad everything lane-dense.

    Zero padding contributes nothing to the dots, so results are unchanged.
    """
    i_size, hidden = params["w1"].shape
    num_actions = params["w4"].shape[1]
    k_pad = _round_up(num_inputs, LANE)
    h_pad = _round_up(hidden, LANE)
    a_pad = _round_up(num_actions, LANE)

    # Branch input column ranges matching the PyTorch slicing
    # (state[:, :i], state[:, i:2i], state[:, -i:]).
    row_starts = (0, i_size, num_inputs - i_size)

    w_bd = jnp.zeros((k_pad, 3 * h_pad), jnp.float32)
    b123 = jnp.zeros((1, 3 * h_pad), jnp.float32)
    for k in range(3):
        r0 = row_starts[k]
        c0 = k * h_pad
        w_bd = w_bd.at[r0:r0 + i_size, c0:c0 + hidden].set(params[f"w{k + 1}"])
        b123 = b123.at[:, c0:c0 + hidden].set(params[f"b{k + 1}"])

    w4 = jnp.pad(params["w4"], ((0, h_pad - hidden), (0, a_pad - num_actions)))
    b4 = jnp.pad(params["b4"], ((0, 0), (0, a_pad - num_actions)))
    return w_bd, b123, w4, b4


def policy_forward(state, params, *, batch_tile=1024):
    """state: (B, num_inputs) f32. params: dict of (in, out)-layout weights/biases."""
    B, num_inputs = state.shape
    hidden = params["w1"].shape[1]
    num_actions = params["w4"].shape[1]
    k_pad = _round_up(num_inputs, LANE)
    h_pad = _round_up(hidden, LANE)
    a_pad = _round_up(num_actions, LANE)

    w_bd, b123, w4, b4 = pack_params(params, num_inputs)

    # Batch tile: multiple of 8 sublanes; large enough to amortize ~0.35us/grid-step,
    # but capped so the parallel grid has >= 2 steps (v7x megacore) for non-tiny batches.
    tb = _round_up(max(int(batch_tile), 1), SUBLANE)
    tb = min(tb, _round_up(B, SUBLANE))
    if _round_up(B, SUBLANE) >= 2 * SUBLANE:
        tb = min(tb, _round_up(pl.cdiv(B, 2), SUBLANE))
    b_pad = _round_up(B, tb)

    # Single pad (batch -> multiple of tb, features -> 128-lane multiple); no per-branch
    # slice/concat repack of the state in the wrapper.
    state_padded = jnp.pad(state, ((0, b_pad - B), (0, k_pad - num_inputs)))

    kernel = functools.partial(_policy_kernel, h_pad=h_pad)

    out_padded = pl.pallas_call(
        kernel,
        out_shape=jax.ShapeDtypeStruct((b_pad, a_pad), jnp.float32),
        grid_spec=pltpu.PrefetchScalarGridSpec(
            num_scalar_prefetch=0,
            grid=(b_pad // tb,),
            in_specs=[
                # Activations pipeline over the batch grid.
                pl.BlockSpec((tb, k_pad), lambda i: (i, 0)),
                # Weights/biases: constant index_map -> VMEM-resident across steps.
                pl.BlockSpec((k_pad, 3 * h_pad), lambda i: (0, 0)),
                pl.BlockSpec((1, 3 * h_pad), lambda i: (0, 0)),
                pl.BlockSpec((h_pad, a_pad), lambda i: (0, 0)),
                pl.BlockSpec((1, a_pad), lambda i: (0, 0)),
            ],
            out_specs=pl.BlockSpec((tb, a_pad), lambda i: (i, 0)),
        ),
        compiler_params=pltpu.CompilerParams(
            dimension_semantics=("parallel",)),  # 2x on v7x (2 TCs); no-op on v5e/v6e
    )(state_padded, w_bd, b123, w4, b4)

    return out_padded[:B, :num_actions]


def init_params(key, num_inputs=300, num_actions=100, hidden_size=256):
    """Deterministic init mimicking torch.nn.Linear default: U(-1/sqrt(fan_in), +1/sqrt(fan_in)).
    Weights stored as (in, out)."""
    i_size = num_inputs // 3
    shapes = {
        "w1": (i_size, hidden_size), "b1": (1, hidden_size),
        "w2": (i_size, hidden_size), "b2": (1, hidden_size),
        "w3": (i_size, hidden_size), "b3": (1, hidden_size),
        "w4": (hidden_size, num_actions), "b4": (1, num_actions),
    }
    fan_in = {
        "w1": i_size, "b1": i_size,
        "w2": i_size, "b2": i_size,
        "w3": i_size, "b3": i_size,
        "w4": hidden_size, "b4": hidden_size,
    }
    params = {}
    keys = jax.random.split(key, len(shapes))
    for k, name in zip(keys, shapes):
        bound = 1.0 / jnp.sqrt(jnp.float32(fan_in[name]))
        params[name] = jax.random.uniform(
            k, shapes[name], dtype=jnp.float32, minval=-bound, maxval=bound)
    return params


def policy_forward_ref(state, params):
    """Pure-JAX reference for correctness checking (mirrors the PyTorch math)."""
    num_inputs = state.shape[1]
    i_size = num_inputs // 3
    s1 = state[:, :i_size]
    s2 = state[:, i_size:2 * i_size]
    s3 = state[:, -i_size:]
    h_u_init = jax.nn.sigmoid(s1 @ params["w1"] + params["b1"])
    h_u_cand = jnp.tanh(s2 @ params["w2"] + params["b2"])
    h_s_gate = jax.nn.sigmoid(s3 @ params["w3"] + params["b3"])
    gated = h_u_init * h_u_cand - h_s_gate * h_u_cand
    return jnp.tanh(gated @ params["w4"] + params["b4"])


if __name__ == "__main__":
    NUM_INPUTS = 300
    NUM_ACTIONS = 100
    HIDDEN = 256

    root = jax.random.PRNGKey(0)
    k_state, k_params, k_state2 = jax.random.split(root, 3)
    params = init_params(k_params, NUM_INPUTS, NUM_ACTIONS, HIDDEN)

    # Small batch (single grid step).
    state = jax.random.normal(k_state, (8, NUM_INPUTS), dtype=jnp.float32)
    out = jax.block_until_ready(policy_forward(state, params))
    ref = policy_forward_ref(state, params)
    assert out.shape == (8, NUM_ACTIONS), out.shape
    assert jnp.allclose(out, ref, atol=3e-5, rtol=1e-5), float(jnp.max(jnp.abs(out - ref)))

    # Larger, non-tile-aligned batch exercising the multi-step parallel grid and
    # the batch-padding path.
    state2 = jax.random.normal(k_state2, (272, NUM_INPUTS), dtype=jnp.float32)
    out2 = jax.block_until_ready(policy_forward(state2, params, batch_tile=64))
    ref2 = policy_forward_ref(state2, params)
    assert out2.shape == (272, NUM_ACTIONS), out2.shape
    assert jnp.allclose(out2, ref2, atol=3e-5, rtol=1e-5), float(jnp.max(jnp.abs(out2 - ref2)))

    print("KERNEL_OK")
</pallas_src>

<mosaic_0001>
module attributes {stable_mosaic.version = 11 : i64} {
  func.func @_policy_kernel(%arg0: i32, %arg1: memref<8x384xf32, #tpu.memory_space<vmem>>, %arg2: memref<384x768xf32, #tpu.memory_space<vmem>>, %arg3: memref<1x768xf32, #tpu.memory_space<vmem>>, %arg4: memref<256x128xf32, #tpu.memory_space<vmem>>, %arg5: memref<1x128xf32, #tpu.memory_space<vmem>>, %arg6: memref<8x128xf32, #tpu.memory_space<vmem>>) attributes {dimension_semantics = [#tpu.dimension_semantics<parallel>], iteration_bounds = array<i64: 1>, scalar_prefetch = 0 : i64, scratch_operands = 0 : i64, tpu.core_type = #tpu.core_type<tc>, window_params = [{transform_indices = @transform_0, window_bounds = array<i64: 8, 384>}, {pipeline_mode = #tpu.pipeline_mode<synchronous>, transform_indices = @transform_1, window_bounds = array<i64: 384, 768>}, {pipeline_mode = #tpu.pipeline_mode<synchronous>, transform_indices = @transform_2, window_bounds = array<i64: 1, 768>}, {pipeline_mode = #tpu.pipeline_mode<synchronous>, transform_indices = @transform_3, window_bounds = array<i64: 256, 128>}, {pipeline_mode = #tpu.pipeline_mode<synchronous>, transform_indices = @transform_4, window_bounds = array<i64: 1, 128>}, {transform_indices = @transform_5, window_bounds = array<i64: 8, 128>}]} {
    %c0 = arith.constant 0 : index
    %c0_0 = arith.constant 0 : index
    %0 = vector.load %arg1[%c0, %c0_0] : memref<8x384xf32, #tpu.memory_space<vmem>>, vector<8x384xf32>
    %c0_1 = arith.constant 0 : index
    %c0_2 = arith.constant 0 : index
    %1 = vector.load %arg2[%c0_1, %c0_2] : memref<384x768xf32, #tpu.memory_space<vmem>>, vector<384x768xf32>
    %cst = arith.constant dense<0.000000e+00> : vector<8x768xf32>
    %2 = tpu.matmul %0, %1, %cst {dimension_numbers = #tpu.dot_dimension_numbers<[1], [0], [0], [1], [0, 0, 1, 1], [], []>} : vector<8x384xf32>, vector<384x768xf32>, vector<8x768xf32> -> vector<8x768xf32>
    %c0_3 = arith.constant 0 : index
    %c0_4 = arith.constant 0 : index
    %3 = vector.load %arg3[%c0_3, %c0_4] : memref<1x768xf32, #tpu.memory_space<vmem>>, vector<1x768xf32>
    %4 = vector.broadcast %3 : vector<1x768xf32> to vector<8x768xf32>
    %5 = arith.addf %2, %4 : vector<8x768xf32>
    %6 = vector.extract_strided_slice %5 {offsets = [0, 0], sizes = [8, 256], strides = [1, 1]} : vector<8x768xf32> to vector<8x256xf32>
    %7 = vector.extract_strided_slice %5 {offsets = [0, 256], sizes = [8, 256], strides = [1, 1]} : vector<8x768xf32> to vector<8x256xf32>
    %8 = vector.extract_strided_slice %5 {offsets = [0, 512], sizes = [8, 256], strides = [1, 1]} : vector<8x768xf32> to vector<8x256xf32>
    %cst_5 = arith.constant 5.000000e-01 : f32
    %9 = vector.broadcast %cst_5 : f32 to vector<8x256xf32>
    %10 = arith.mulf %9, %6 : vector<8x256xf32>
    %11 = math.tanh %10 : vector<8x256xf32>
    %cst_6 = arith.constant 1.000000e+00 : f32
    %12 = vector.broadcast %cst_6 : f32 to vector<8x256xf32>
    %13 = arith.addf %11, %12 : vector<8x256xf32>
    %cst_7 = arith.constant 5.000000e-01 : f32
    %14 = vector.broadcast %cst_7 : f32 to vector<8x256xf32>
    %15 = arith.mulf %14, %13 : vector<8x256xf32>
    %16 = math.tanh %7 : vector<8x256xf32>
    %cst_8 = arith.constant 5.000000e-01 : f32
    %17 = vector.broadcast %cst_8 : f32 to vector<8x256xf32>
    %18 = arith.mulf %17, %8 : vector<8x256xf32>
    %19 = math.tanh %18 : vector<8x256xf32>
    %cst_9 = arith.constant 1.000000e+00 : f32
    %20 = vector.broadcast %cst_9 : f32 to vector<8x256xf32>
    %21 = arith.addf %19, %20 : vector<8x256xf32>
    %cst_10 = arith.constant 5.000000e-01 : f32
    %22 = vector.broadcast %cst_10 : f32 to vector<8x256xf32>
    %23 = arith.mulf %22, %21 : vector<8x256xf32>
    %24 = arith.subf %15, %23 : vector<8x256xf32>
    %25 = arith.mulf %24, %16 : vector<8x256xf32>
    %c0_11 = arith.constant 0 : index
    %c0_12 = arith.constant 0 : index
    %26 = vector.load %arg4[%c0_11, %c0_12] : memref<256x128xf32, #tpu.memory_space<vmem>>, vector<256x128xf32>
    %cst_13 = arith.constant dense<0.000000e+00> : vector<8x128xf32>
    %27 = tpu.matmul %25, %26, %cst_13 {dimension_numbers = #tpu.dot_dimension_numbers<[1], [0], [0], [1], [0, 0, 1, 1], [], []>} : vector<8x256xf32>, vector<256x128xf32>, vector<8x128xf32> -> vector<8x128xf32>
    %c0_14 = arith.constant 0 : index
    %c0_15 = arith.constant 0 : index
    %28 = vector.load %arg5[%c0_14, %c0_15] : memref<1x128xf32, #tpu.memory_space<vmem>>, vector<1x128xf32>
    %29 = vector.broadcast %28 : vector<1x128xf32> to vector<8x128xf32>
    %30 = arith.addf %27, %29 : vector<8x128xf32>
    %31 = math.tanh %30 : vector<8x128xf32>
    %c0_16 = arith.constant 0 : index
    %c0_17 = arith.constant 0 : index
    %32 = vector.load %arg6[%c0_16, %c0_17] : memref<8x128xf32, #tpu.memory_space<vmem>>, vector<8x128xf32>
    tpu.vector_store %arg6[%c0_16, %c0_17], %31 {strides = array<i32>} : memref<8x128xf32, #tpu.memory_space<vmem>>, vector<8x128xf32>,
    return
  }
  func.func @transform_0(%arg0: i32) -> (i32, i32) {
    %c0_i32 = arith.constant 0 : i32
    %c0_i32_0 = arith.constant 0 : i32
    return %arg0, %c0_i32 : i32, i32
  }
  func.func @transform_1(%arg0: i32) -> (i32, i32) {
    %c0_i32 = arith.constant 0 : i32
    %c0_i32_0 = arith.constant 0 : i32
    %c0_i32_1 = arith.constant 0 : i32
    return %c0_i32, %c0_i32_0 : i32, i32
  }
  func.func @transform_2(%arg0: i32) -> (i32, i32) {
    %c0_i32 = arith.constant 0 : i32
    %c0_i32_0 = arith.constant 0 : i32
    %c0_i32_1 = arith.constant 0 : i32
    return %c0_i32, %c0_i32_0 : i32, i32
  }
  func.func @transform_3(%arg0: i32) -> (i32, i32) {
    %c0_i32 = arith.constant 0 : i32
    %c0_i32_0 = arith.constant 0 : i32
    %c0_i32_1 = arith.constant 0 : i32
    return %c0_i32, %c0_i32_0 : i32, i32
  }
  func.func @transform_4(%arg0: i32) -> (i32, i32) {
    %c0_i32 = arith.constant 0 : i32
    %c0_i32_0 = arith.constant 0 : i32
    %c0_i32_1 = arith.constant 0 : i32
    return %c0_i32, %c0_i32_0 : i32, i32
  }
  func.func @transform_5(%arg0: i32) -> (i32, i32) {
    %c0_i32 = arith.constant 0 : i32
    %c0_i32_0 = arith.constant 0 : i32
    return %arg0, %c0_i32 : i32, i32
  }
}

</mosaic_0001>

<llo_original>
// kernel: tpu_custom_call.1
$region0: #{tpu_custom_call.1}
  #allocation0 [shape = 'u32[]', space=smem, size = 0x4, offset = 0x4, fixed_abs, tag = 'smem constant byte address 0x4 - core index']
  #allocation1 [shape = 'u32[72,128]{1,0:T(1,128)}', space=vmem, size = 0x9000, scoped, tag = 'internal scratch']
  %s0 = inlined_call_operand.hbm [shape: f32[8,384], index: 0, kind: input, shape index: {}]
  %s1 = inlined_call_operand.hbm [shape: f32[384,768], index: 1, kind: input, shape index: {}]
  %s2 = inlined_call_operand.hbm [shape: f32[1,768], index: 2, kind: input, shape index: {}]
  %s3 = inlined_call_operand.hbm [shape: f32[256,128], index: 3, kind: input, shape index: {}]
  %s4 = inlined_call_operand.hbm [shape: f32[1,128], index: 4, kind: input, shape index: {}]
  %s5 = inlined_call_operand.hbm [shape: f32[8,128], index: 5, kind: output, shape index: {}]
  %s6 = sld [smem:[#allocation0]]
  $region50: #{tpu_custom_call.1} parent=0
    _
  %s8 = ssub.s32 1, %s6
  %s9 = scalar_select 0, %s8, %s6
  $region1: #{tpu_custom_call.1} parent=0
    #allocation2 [shape = 'u8[12288]{0}', space=vmem, size = 0x3000, scoped, tag = 'input window, operand 0, single buffered']
    #allocation3 [shape = 's32[1]{0}', space=sflag, size = 0x4, scoped, tag = 'scoped memory for tpu_custom_call.1']
    #allocation4 [shape = 's32[1]{0}', space=sflag, size = 0x4, scoped, tag = 'scoped memory for tpu_custom_call.1']
    #allocation5 [shape = 'u8[1179648]{0}', space=vmem, size = 0x120000, scoped, tag = 'input window, operand 1, single buffered']
    #allocation6 [shape = 's32[1]{0}', space=sflag, size = 0x4, scoped, tag = 'scoped memory for tpu_custom_call.1']
    #allocation7 [shape = 'u8[3072]{0}', space=vmem, size = 0xc00, scoped, tag = 'input window, operand 2, single buffered']
    #allocation8 [shape = 'u8[131072]{0}', space=vmem, size = 0x20000, scoped, tag = 'input window, operand 3, single buffered']
    #allocation9 [shape = 's32[1]{0}', space=sflag, size = 0x4, scoped, tag = 'scoped memory for tpu_custom_call.1']
    #allocation10 [shape = 'u8[512]{0}', space=vmem, size = 0x400, scoped, tag = 'input window, operand 4, single buffered']
    #allocation11 [shape = 'u8[4096]{0}', space=vmem, size = 0x1000, scoped, tag = 'output window, operand 0, single buffered']
    %10 = vsyncpa [#allocation3], 0
    %11 = vsyncpa [#allocation6], 0
    %12 = vsyncpa [#allocation9], 0
    %13 = vsyncpa [#allocation4], 0
    // Predicated region
    $region2: #{tpu_custom_call.1} parent=1 // pred_check
      _
    $region3: #{tpu_custom_call.1} parent=1 // pred_check_branch
      %15 = sbr.rel (0) target = $region5
    $region4: #{tpu_custom_call.1} parent=1 // pred_region
      %17 = vsyncadd [#allocation3], 0
      %s19 = sshll.u32 %s0, 4
      %s20 = int_to_ptr.hbm [resolvable:$true] %s19
      %s21 = sshll.u32 [#allocation2], 4
      %s22 = int_to_ptr.vmem [resolvable:$true] %s21
      %24 = dma.hbm_to_vmem [thread:$0]  %s20, 384, %s22, [#allocation3]
    $region5: #{tpu_custom_call.1} parent=1 // pred_fallthru
      _
    // Predicated region
    $region6: #{tpu_custom_call.1} parent=1 // pred_check
      _
    $region7: #{tpu_custom_call.1} parent=1 // pred_check_branch
      %26 = sbr.rel (0) target = $region9
    $region8: #{tpu_custom_call.1} parent=1 // pred_region
      %28 = vsyncadd [#allocation6], 0
      %s29 = sshll.u32 %s1, 4
      %s30 = int_to_ptr.hbm [resolvable:$true] %s29
      %s31 = sshll.u32 [#allocation5], 4
      %s32 = int_to_ptr.vmem [resolvable:$true] %s31
      %37 = dma.hbm_to_vmem [thread:$0]  %s30, 36864, %s32, [#allocation6], 768, 768, 48
    $region9: #{tpu_custom_call.1} parent=1 // pred_fallthru
      _
    // Predicated region
    $region10: #{tpu_custom_call.1} parent=1 // pred_check
      _
    $region11: #{tpu_custom_call.1} parent=1 // pred_check_branch
      %39 = sbr.rel (0) target = $region13
    $region12: #{tpu_custom_call.1} parent=1 // pred_region
      %41 = vsyncadd [#allocation6], 0
      %s43 = sshll.u32 %s2, 4
      %s44 = int_to_ptr.hbm [resolvable:$true] %s43
      %s45 = sshll.u32 [#allocation7], 4
      %s46 = int_to_ptr.vmem [resolvable:$true] %s45
      %48 = dma.hbm_to_vmem [thread:$0]  %s44, 96, %s46, [#allocation6]
    $region13: #{tpu_custom_call.1} parent=1 // pred_fallthru
      _
    // Predicated region
    $region14: #{tpu_custom_call.1} parent=1 // pred_check
      _
    $region15: #{tpu_custom_call.1} parent=1 // pred_check_branch
      %50 = sbr.rel (0) target = $region17
    $region16: #{tpu_custom_call.1} parent=1 // pred_region
      %52 = vsyncadd [#allocation9], 0
      %s53 = sshll.u32 %s3, 4
      %s54 = int_to_ptr.hbm [resolvable:$true] %s53
      %s55 = sshll.u32 [#allocation8], 4
      %s56 = int_to_ptr.vmem [resolvable:$true] %s55
      %61 = dma.hbm_to_vmem [thread:$0]  %s54, 4096, %s56, [#allocation9], 128, 128, 8
    $region17: #{tpu_custom_call.1} parent=1 // pred_fallthru
      _
    // Predicated region
    $region18: #{tpu_custom_call.1} parent=1 // pred_check
      _
    $region19: #{tpu_custom_call.1} parent=1 // pred_check_branch
      %63 = sbr.rel (0) target = $region21
    $region20: #{tpu_custom_call.1} parent=1 // pred_region
      %65 = vsyncadd [#allocation9], 0
      %s67 = sshll.u32 %s4, 4
      %s68 = int_to_ptr.hbm [resolvable:$true] %s67
      %s69 = sshll.u32 [#allocation10], 4
      %s70 = int_to_ptr.vmem [resolvable:$true] %s69
      %72 = dma.hbm_to_vmem [thread:$0]  %s68, 16, %s70, [#allocation9]
    $region21: #{tpu_custom_call.1} parent=1 // pred_fallthru
      _
    // Predicated region
    $region22: #{tpu_custom_call.1} parent=1 // pred_check
      _
    $region23: #{tpu_custom_call.1} parent=1 // pred_check_branch
      %74 = sbr.rel (0) target = $region25
    $region24: #{tpu_custom_call.1} parent=1 // pred_region
      %76 = dma.done [#allocation3], 384
    $region25: #{tpu_custom_call.1} parent=1 // pred_fallthru
      _
    // Predicated region
    $region26: #{tpu_custom_call.1} parent=1 // pred_check
      _
    $region27: #{tpu_custom_call.1} parent=1 // pred_check_branch
      %78 = sbr.rel (0) target = $region29
    $region28: #{tpu_custom_call.1} parent=1 // pred_region
      %80 = dma.done [#allocation6], 36864
    $region29: #{tpu_custom_call.1} parent=1 // pred_fallthru
      _
    // Predicated region
    $region30: #{tpu_custom_call.1} parent=1 // pred_check
      _
    $region31: #{tpu_custom_call.1} parent=1 // pred_check_branch
      %82 = sbr.rel (0) target = $region33
    $region32: #{tpu_custom_call.1} parent=1 // pred_region
      %84 = dma.done [#allocation6], 96
    $region33: #{tpu_custom_call.1} parent=1 // pred_fallthru
      _
    // Predicated region
    $region34: #{tpu_custom_call.1} parent=1 // pred_check
      _
    $region35: #{tpu_custom_call.1} parent=1 // pred_check_branch
      %86 = sbr.rel (0) target = $region37
    $region36: #{tpu_custom_call.1} parent=1 // pred_region
      %88 = dma.done [#allocation9], 4096
    $region37: #{tpu_custom_call.1} parent=1 // pred_fallthru
      _
    // Predicated region
    $region38: #{tpu_custom_call.1} parent=1 // pred_check
      _
    $region39: #{tpu_custom_call.1} parent=1 // pred_check_branch
      %90 = sbr.rel (0) target = $region41
    $region40: #{tpu_custom_call.1} parent=1 // pred_region
      %92 = dma.done [#allocation9], 16
    $region41: #{tpu_custom_call.1} parent=1 // pred_fallthru
      _
    %v93 = vld [vmem:[#allocation2] sm:$0xff]
    %v94 = vld [vmem:[#allocation2 + $0x8] sm:$0xff]
    %v95 = vld [vmem:[#allocation2 + $0x10] sm:$0xff]
    %v96 = vld [vmem:[#allocation5] sm:$0xff]
    %v97 = vld [vmem:[#allocation5 + $0x8] sm:$0xff]
    %v98 = vld [vmem:[#allocation5 + $0x10] sm:$0xff]
    %v99 = vld [vmem:[#allocation5 + $0x18] sm:$0xff]
    %v100 = vld [vmem:[#allocation5 + $0x20] sm:$0xff]
    %v101 = vld [vmem:[#allocation5 + $0x28] sm:$0xff]
    %v102 = vld [vmem:[#allocation5 + $0x30] sm:$0xff]
    %v103 = vld [vmem:[#allocation5 + $0x38] sm:$0xff]
    %v104 = vld [vmem:[#allocation5 + $0x40] sm:$0xff]
    %v105 = vld [vmem:[#allocation5 + $0x48] sm:$0xff]
    %v106 = vld [vmem:[#allocation5 + $0x50] sm:$0xff]
    %v107 = vld [vmem:[#allocation5 + $0x58] sm:$0xff]
    %v108 = vld [vmem:[#allocation5 + $0x60] sm:$0xff]
    %v109 = vld [vmem:[#allocation5 + $0x68] sm:$0xff]
    %v110 = vld [vmem:[#allocation5 + $0x70] sm:$0xff]
    %v111 = vld [vmem:[#allocation5 + $0x78] sm:$0xff]
    %v112 = vld [vmem:[#allocation5 + $0x80] sm:$0xff]
    %v113 = vld [vmem:[#allocation5 + $0x88] sm:$0xff]
    %v114 = vld [vmem:[#allocation5 + $0x90] sm:$0xff]
    %v115 = vld [vmem:[#allocation5 + $0x98] sm:$0xff]
    %v116 = vld [vmem:[#allocation5 + $0xa0] sm:$0xff]
    %v117 = vld [vmem:[#allocation5 + $0xa8] sm:$0xff]
    %v118 = vld [vmem:[#allocation5 + $0xb0] sm:$0xff]
    %v119 = vld [vmem:[#allocation5 + $0xb8] sm:$0xff]
    %v120 = vld [vmem:[#allocation5 + $0xc0] sm:$0xff]
    %v121 = vld [vmem:[#allocation5 + $0xc8] sm:$0xff]
    %v122 = vld [vmem:[#allocation5 + $0xd0] sm:$0xff]
    %v123 = vld [vmem:[#allocation5 + $0xd8] sm:$0xff]
    %v124 = vld [vmem:[#allocation5 + $0xe0] sm:$0xff]
    %v125 = vld [vmem:[#allocation5 + $0xe8] sm:$0xff]
    %v126 = vld [vmem:[#allocation5 + $0xf0] sm:$0xff]
    %v127 = vld [vmem:[#allocation5 + $0xf8] sm:$0xff]
    %v128 = vld [vmem:[#allocation5 + $0x100] sm:$0xff]
    %v129 = vld [vmem:[#allocation5 + $0x108] sm:$0xff]
    %v130 = vld [vmem:[#allocation5 + $0x110] sm:$0xff]
    %v131 = vld [vmem:[#allocation5 + $0x118] sm:$0xff]
    %v132 = vld [vmem:[#allocation5 + $0x120] sm:$0xff]
    %v133 = vld [vmem:[#allocation5 + $0x128] sm:$0xff]
    %v134 = vld [vmem:[#allocation5 + $0x130] sm:$0xff]
    %v135 = vld [vmem:[#allocation5 + $0x138] sm:$0xff]
    %v136 = vld [vmem:[#allocation5 + $0x140] sm:$0xff]
    %v137 = vld [vmem:[#allocation5 + $0x148] sm:$0xff]
    %v138 = vld [vmem:[#allocation5 + $0x150] sm:$0xff]
    %v139 = vld [vmem:[#allocation5 + $0x158] sm:$0xff]
    %v140 = vld [vmem:[#allocation5 + $0x160] sm:$0xff]
    %v141 = vld [vmem:[#allocation5 + $0x168] sm:$0xff]
    %v142 = vld [vmem:[#allocation5 + $0x170] sm:$0xff]
    %v143 = vld [vmem:[#allocation5 + $0x178] sm:$0xff]
    %v144 = vld [vmem:[#allocation5 + $0x180] sm:$0xff]
    %v145 = vld [vmem:[#allocation5 + $0x188] sm:$0xff]
    %v146 = vld [vmem:[#allocation5 + $0x190] sm:$0xff]
    %v147 = vld [vmem:[#allocation5 + $0x198] sm:$0xff]
    %v148 = vld [vmem:[#allocation5 + $0x1a0] sm:$0xff]
    %v149 = vld [vmem:[#allocation5 + $0x1a8] sm:$0xff]
    %v150 = vld [vmem:[#allocation5 + $0x1b0] sm:$0xff]
    %v151 = vld [vmem:[#allocation5 + $0x1b8] sm:$0xff]
    %v152 = vld [vmem:[#allocation5 + $0x1c0] sm:$0xff]
    %v153 = vld [vmem:[#allocation5 + $0x1c8] sm:$0xff]
    %v154 = vld [vmem:[#allocation5 + $0x1d0] sm:$0xff]
    %v155 = vld [vmem:[#allocation5 + $0x1d8] sm:$0xff]
    %v156 = vld [vmem:[#allocation5 + $0x1e0] sm:$0xff]
    %v157 = vld [vmem:[#allocation5 + $0x1e8] sm:$0xff]
    %v158 = vld [vmem:[#allocation5 + $0x1f0] sm:$0xff]
    %v159 = vld [vmem:[#allocation5 + $0x1f8] sm:$0xff]
    %v160 = vld [vmem:[#allocation5 + $0x200] sm:$0xff]
    %v161 = vld [vmem:[#allocation5 + $0x208] sm:$0xff]
    %v162 = vld [vmem:[#allocation5 + $0x210] sm:$0xff]
    %v163 = vld [vmem:[#allocation5 + $0x218] sm:$0xff]
    %v164 = vld [vmem:[#allocation5 + $0x220] sm:$0xff]
    %v165 = vld [vmem:[#allocation5 + $0x228] sm:$0xff]
    %v166 = vld [vmem:[#allocation5 + $0x230] sm:$0xff]
    %v167 = vld [vmem:[#allocation5 + $0x238] sm:$0xff]
    %v168 = vld [vmem:[#allocation5 + $0x240] sm:$0xff]
    %v169 = vld [vmem:[#allocation5 + $0x248] sm:$0xff]
    %v170 = vld [vmem:[#allocation5 + $0x250] sm:$0xff]
    %v171 = vld [vmem:[#allocation5 + $0x258] sm:$0xff]
    %v172 = vld [vmem:[#allocation5 + $0x260] sm:$0xff]
    %v173 = vld [vmem:[#allocation5 + $0x268] sm:$0xff]
    %v174 = vld [vmem:[#allocation5 + $0x270] sm:$0xff]
    %v175 = vld [vmem:[#allocation5 + $0x278] sm:$0xff]
    %v176 = vld [vmem:[#allocation5 + $0x280] sm:$0xff]
    %v177 = vld [vmem:[#allocation5 + $0x288] sm:$0xff]
    %v178 = vld [vmem:[#allocation5 + $0x290] sm:$0xff]
    %v179 = vld [vmem:[#allocation5 + $0x298] sm:$0xff]
    %v180 = vld [vmem:[#allocation5 + $0x2a0] sm:$0xff]
    %v181 = vld [vmem:[#allocation5 + $0x2a8] sm:$0xff]
    %v182 = vld [vmem:[#allocation5 + $0x2b0] sm:$0xff]
    %v183 = vld [vmem:[#allocation5 + $0x2b8] sm:$0xff]
    %v184 = vld [vmem:[#allocation5 + $0x2c0] sm:$0xff]
    %v185 = vld [vmem:[#allocation5 + $0x2c8] sm:$0xff]
    %v186 = vld [vmem:[#allocation5 + $0x2d0] sm:$0xff]
    %v187 = vld [vmem:[#allocation5 + $0x2d8] sm:$0xff]
    %v188 = vld [vmem:[#allocation5 + $0x2e0] sm:$0xff]
    %v189 = vld [vmem:[#allocation5 + $0x2e8] sm:$0xff]
    %v190 = vld [vmem:[#allocation5 + $0x2f0] sm:$0xff]
    %v191 = vld [vmem:[#allocation5 + $0x2f8] sm:$0xff]
    %v192 = vld [vmem:[#allocation5 + $0x300] sm:$0xff]
    %v193 = vld [vmem:[#allocation5 + $0x308] sm:$0xff]
    %v194 = vld [vmem:[#allocation5 + $0x310] sm:$0xff]
    %v195 = vld [vmem:[#allocation5 + $0x318] sm:$0xff]
    %v196 = vld [vmem:[#allocation5 + $0x320] sm:$0xff]
    %v197 = vld [vmem:[#allocation5 + $0x328] sm:$0xff]
    %v198 = vld [vmem:[#allocation5 + $0x330] sm:$0xff]
    %v199 = vld [vmem:[#allocation5 + $0x338] sm:$0xff]
    %v200 = vld [vmem:[#allocation5 + $0x340] sm:$0xff]
    %v201 = vld [vmem:[#allocation5 + $0x348] sm:$0xff]
    %v202 = vld [vmem:[#allocation5 + $0x350] sm:$0xff]
    %v203 = vld [vmem:[#allocation5 + $0x358] sm:$0xff]
    %v204 = vld [vmem:[#allocation5 + $0x360] sm:$0xff]
    %v205 = vld [vmem:[#allocation5 + $0x368] sm:$0xff]
    %v206 = vld [vmem:[#allocation5 + $0x370] sm:$0xff]
    %v207 = vld [vmem:[#allocation5 + $0x378] sm:$0xff]
    %v208 = vld [vmem:[#allocation5 + $0x380] sm:$0xff]
    %v209 = vld [vmem:[#allocation5 + $0x388] sm:$0xff]
    %v210 = vld [vmem:[#allocation5 + $0x390] sm:$0xff]
    %v211 = vld [vmem:[#allocation5 + $0x398] sm:$0xff]
    %v212 = vld [vmem:[#allocation5 + $0x3a0] sm:$0xff]
    %v213 = vld [vmem:[#allocation5 + $0x3a8] sm:$0xff]
    %v214 = vld [vmem:[#allocation5 + $0x3b0] sm:$0xff]
    %v215 = vld [vmem:[#allocation5 + $0x3b8] sm:$0xff]
    %v216 = vld [vmem:[#allocation5 + $0x3c0] sm:$0xff]
    %v217 = vld [vmem:[#allocation5 + $0x3c8] sm:$0xff]
    %v218 = vld [vmem:[#allocation5 + $0x3d0] sm:$0xff]
    %v219 = vld [vmem:[#allocation5 + $0x3d8] sm:$0xff]
    %v220 = vld [vmem:[#allocation5 + $0x3e0] sm:$0xff]
    %v221 = vld [vmem:[#allocation5 + $0x3e8] sm:$0xff]
    %v222 = vld [vmem:[#allocation5 + $0x3f0] sm:$0xff]
    %v223 = vld [vmem:[#allocation5 + $0x3f8] sm:$0xff]
    %v224 = vld [vmem:[#allocation5 + $0x400] sm:$0xff]
    %v225 = vld [vmem:[#allocation5 + $0x408] sm:$0xff]
    %v226 = vld [vmem:[#allocation5 + $0x410] sm:$0xff]
    %v227 = vld [vmem:[#allocation5 + $0x418] sm:$0xff]
    %v228 = vld [vmem:[#allocation5 + $0x420] sm:$0xff]
    %v229 = vld [vmem:[#allocation5 + $0x428] sm:$0xff]
    %v230 = vld [vmem:[#allocation5 + $0x430] sm:$0xff]
    %v231 = vld [vmem:[#allocation5 + $0x438] sm:$0xff]
    %v232 = vld [vmem:[#allocation5 + $0x440] sm:$0xff]
    %v233 = vld [vmem:[#allocation5 + $0x448] sm:$0xff]
    %v234 = vld [vmem:[#allocation5 + $0x450] sm:$0xff]
    %v235 = vld [vmem:[#allocation5 + $0x458] sm:$0xff]
    %v236 = vld [vmem:[#allocation5 + $0x460] sm:$0xff]
    %v237 = vld [vmem:[#allocation5 + $0x468] sm:$0xff]
    %v238 = vld [vmem:[#allocation5 + $0x470] sm:$0xff]
    %v239 = vld [vmem:[#allocation5 + $0x478] sm:$0xff]
    %v240 = vld [vmem:[#allocation5 + $0x480] sm:$0xff]
    %v241 = vld [vmem:[#allocation5 + $0x488] sm:$0xff]
    %v242 = vld [vmem:[#allocation5 + $0x490] sm:$0xff]
    %v243 = vld [vmem:[#allocation5 + $0x498] sm:$0xff]
    %v244 = vld [vmem:[#allocation5 + $0x4a0] sm:$0xff]
    %v245 = vld [vmem:[#allocation5 + $0x4a8] sm:$0xff]
    %v246 = vld [vmem:[#allocation5 + $0x4b0] sm:$0xff]
    %v247 = vld [vmem:[#allocation5 + $0x4b8] sm:$0xff]
    %v248 = vld [vmem:[#allocation5 + $0x4c0] sm:$0xff]
    %v249 = vld [vmem:[#allocation5 + $0x4c8] sm:$0xff]
    %v250 = vld [vmem:[#allocation5 + $0x4d0] sm:$0xff]
    %v251 = vld [vmem:[#allocation5 + $0x4d8] sm:$0xff]
    %v252 = vld [vmem:[#allocation5 + $0x4e0] sm:$0xff]
    %v253 = vld [vmem:[#allocation5 + $0x4e8] sm:$0xff]
    %v254 = vld [vmem:[#allocation5 + $0x4f0] sm:$0xff]
    %v255 = vld [vmem:[#allocation5 + $0x4f8] sm:$0xff]
    %v256 = vld [vmem:[#allocation5 + $0x500] sm:$0xff]
    %v257 = vld [vmem:[#allocation5 + $0x508] sm:$0xff]
    %v258 = vld [vmem:[#allocation5 + $0x510] sm:$0xff]
    %v259 = vld [vmem:[#allocation5 + $0x518] sm:$0xff]
    %v260 = vld [vmem:[#allocation5 + $0x520] sm:$0xff]
    %v261 = vld [vmem:[#allocation5 + $0x528] sm:$0xff]
    %v262 = vld [vmem:[#allocation5 + $0x530] sm:$0xff]
    %v263 = vld [vmem:[#allocation5 + $0x538] sm:$0xff]
    %v264 = vld [vmem:[#allocation5 + $0x540] sm:$0xff]
    %v265 = vld [vmem:[#allocation5 + $0x548] sm:$0xff]
    %v266 = vld [vmem:[#allocation5 + $0x550] sm:$0xff]
    %v267 = vld [vmem:[#allocation5 + $0x558] sm:$0xff]
    %v268 = vld [vmem:[#allocation5 + $0x560] sm:$0xff]
    %v269 = vld [vmem:[#allocation5 + $0x568] sm:$0xff]
    %v270 = vld [vmem:[#allocation5 + $0x570] sm:$0xff]
    %v271 = vld [vmem:[#allocation5 + $0x578] sm:$0xff]
    %v272 = vld [vmem:[#allocation5 + $0x580] sm:$0xff]
    %v273 = vld [vmem:[#allocation5 + $0x588] sm:$0xff]
    %v274 = vld [vmem:[#allocation5 + $0x590] sm:$0xff]
    %v275 = vld [vmem:[#allocation5 + $0x598] sm:$0xff]
    %v276 = vld [vmem:[#allocation5 + $0x5a0] sm:$0xff]
    %v277 = vld [vmem:[#allocation5 + $0x5a8] sm:$0xff]
    %v278 = vld [vmem:[#allocation5 + $0x5b0] sm:$0xff]
    %v279 = vld [vmem:[#allocation5 + $0x5b8] sm:$0xff]
    %v280 = vld [vmem:[#allocation5 + $0x5c0] sm:$0xff]
    %v281 = vld [vmem:[#allocation5 + $0x5c8] sm:$0xff]
    %v282 = vld [vmem:[#allocation5 + $0x5d0] sm:$0xff]
    %v283 = vld [vmem:[#allocation5 + $0x5d8] sm:$0xff]
    %v284 = vld [vmem:[#allocation5 + $0x5e0] sm:$0xff]
    %v285 = vld [vmem:[#allocation5 + $0x5e8] sm:$0xff]
    %v286 = vld [vmem:[#allocation5 + $0x5f0] sm:$0xff]
    %v287 = vld [vmem:[#allocation5 + $0x5f8] sm:$0xff]
    %v288 = vld [vmem:[#allocation5 + $0x600] sm:$0xff]
    %v289 = vld [vmem:[#allocation5 + $0x608] sm:$0xff]
    %v290 = vld [vmem:[#allocation5 + $0x610] sm:$0xff]
    %v291 = vld [vmem:[#allocation5 + $0x618] sm:$0xff]
    %v292 = vld [vmem:[#allocation5 + $0x620] sm:$0xff]
    %v293 = vld [vmem:[#allocation5 + $0x628] sm:$0xff]
    %v294 = vld [vmem:[#allocation5 + $0x630] sm:$0xff]
    %v295 = vld [vmem:[#allocation5 + $0x638] sm:$0xff]
    %v296 = vld [vmem:[#allocation5 + $0x640] sm:$0xff]
    %v297 = vld [vmem:[#allocation5 + $0x648] sm:$0xff]
    %v298 = vld [vmem:[#allocation5 + $0x650] sm:$0xff]
    %v299 = vld [vmem:[#allocation5 + $0x658] sm:$0xff]
    %v300 = vld [vmem:[#allocation5 + $0x660] sm:$0xff]
    %v301 = vld [vmem:[#allocation5 + $0x668] sm:$0xff]
    %v302 = vld [vmem:[#allocation5 + $0x670] sm:$0xff]
    %v303 = vld [vmem:[#allocation5 + $0x678] sm:$0xff]
    %v304 = vld [vmem:[#allocation5 + $0x680] sm:$0xff]
    %v305 = vld [vmem:[#allocation5 + $0x688] sm:$0xff]
    %v306 = vld [vmem:[#allocation5 + $0x690] sm:$0xff]
    %v307 = vld [vmem:[#allocation5 + $0x698] sm:$0xff]
    %v308 = vld [vmem:[#allocation5 + $0x6a0] sm:$0xff]
    %v309 = vld [vmem:[#allocation5 + $0x6a8] sm:$0xff]
    %v310 = vld [vmem:[#allocation5 + $0x6b0] sm:$0xff]
    %v311 = vld [vmem:[#allocation5 + $0x6b8] sm:$0xff]
    %v312 = vld [vmem:[#allocation5 + $0x6c0] sm:$0xff]
    %v313 = vld [vmem:[#allocation5 + $0x6c8] sm:$0xff]
    %v314 = vld [vmem:[#allocation5 + $0x6d0] sm:$0xff]
    %v315 = vld [vmem:[#allocation5 + $0x6d8] sm:$0xff]
    %v316 = vld [vmem:[#allocation5 + $0x6e0] sm:$0xff]
    %v317 = vld [vmem:[#allocation5 + $0x6e8] sm:$0xff]
    %v318 = vld [vmem:[#allocation5 + $0x6f0] sm:$0xff]
    %v319 = vld [vmem:[#allocation5 + $0x6f8] sm:$0xff]
    %v320 = vld [vmem:[#allocation5 + $0x700] sm:$0xff]
    %v321 = vld [vmem:[#allocation5 + $0x708] sm:$0xff]
    %v322 = vld [vmem:[#allocation5 + $0x710] sm:$0xff]
    %v323 = vld [vmem:[#allocation5 + $0x718] sm:$0xff]
    %v324 = vld [vmem:[#allocation5 + $0x720] sm:$0xff]
    %v325 = vld [vmem:[#allocation5 + $0x728] sm:$0xff]
    %v326 = vld [vmem:[#allocation5 + $0x730] sm:$0xff]
    %v327 = vld [vmem:[#allocation5 + $0x738] sm:$0xff]
    %v328 = vld [vmem:[#allocation5 + $0x740] sm:$0xff]
    %v329 = vld [vmem:[#allocation5 + $0x748] sm:$0xff]
    %v330 = vld [vmem:[#allocation5 + $0x750] sm:$0xff]
    %v331 = vld [vmem:[#allocation5 + $0x758] sm:$0xff]
    %v332 = vld [vmem:[#allocation5 + $0x760] sm:$0xff]
    %v333 = vld [vmem:[#allocation5 + $0x768] sm:$0xff]
    %v334 = vld [vmem:[#allocation5 + $0x770] sm:$0xff]
    %v335 = vld [vmem:[#allocation5 + $0x778] sm:$0xff]
    %v336 = vld [vmem:[#allocation5 + $0x780] sm:$0xff]
    %v337 = vld [vmem:[#allocation5 + $0x788] sm:$0xff]
    %v338 = vld [vmem:[#allocation5 + $0x790] sm:$0xff]
    %v339 = vld [vmem:[#allocation5 + $0x798] sm:$0xff]
    %v340 = vld [vmem:[#allocation5 + $0x7a0] sm:$0xff]
    %v341 = vld [vmem:[#allocation5 + $0x7a8] sm:$0xff]
    %v342 = vld [vmem:[#allocation5 + $0x7b0] sm:$0xff]
    %v343 = vld [vmem:[#allocation5 + $0x7b8] sm:$0xff]
    %v344 = vld [vmem:[#allocation5 + $0x7c0] sm:$0xff]
    %v345 = vld [vmem:[#allocation5 + $0x7c8] sm:$0xff]
    %v346 = vld [vmem:[#allocation5 + $0x7d0] sm:$0xff]
    %v347 = vld [vmem:[#allocation5 + $0x7d8] sm:$0xff]
    %v348 = vld [vmem:[#allocation5 + $0x7e0] sm:$0xff]
    %v349 = vld [vmem:[#allocation5 + $0x7e8] sm:$0xff]
    %v350 = vld [vmem:[#allocation5 + $0x7f0] sm:$0xff]
    %v351 = vld [vmem:[#allocation5 + $0x7f8] sm:$0xff]
    %v352 = vld [vmem:[#allocation5 + $0x800] sm:$0xff]
    %v353 = vld [vmem:[#allocation5 + $0x808] sm:$0xff]
    %v354 = vld [vmem:[#allocation5 + $0x810] sm:$0xff]
    %v355 = vld [vmem:[#allocation5 + $0x818] sm:$0xff]
    %v356 = vld [vmem:[#allocation5 + $0x820] sm:$0xff]
    %v357 = vld [vmem:[#allocation5 + $0x828] sm:$0xff]
    %v358 = vld [vmem:[#allocation5 + $0x830] sm:$0xff]
    %v359 = vld [vmem:[#allocation5 + $0x838] sm:$0xff]
    %v360 = vld [vmem:[#allocation5 + $0x840] sm:$0xff]
    %v361 = vld [vmem:[#allocation5 + $0x848] sm:$0xff]
    %v362 = vld [vmem:[#allocation5 + $0x850] sm:$0xff]
    %v363 = vld [vmem:[#allocation5 + $0x858] sm:$0xff]
    %v364 = vld [vmem:[#allocation5 + $0x860] sm:$0xff]
    %v365 = vld [vmem:[#allocation5 + $0x868] sm:$0xff]
    %v366 = vld [vmem:[#allocation5 + $0x870] sm:$0xff]
    %v367 = vld [vmem:[#allocation5 + $0x878] sm:$0xff]
    %v368 = vld [vmem:[#allocation5 + $0x880] sm:$0xff]
    %v369 = vld [vmem:[#allocation5 + $0x888] sm:$0xff]
    %v370 = vld [vmem:[#allocation5 + $0x890] sm:$0xff]
    %v371 = vld [vmem:[#allocation5 + $0x898] sm:$0xff]
    %v372 = vld [vmem:[#allocation5 + $0x8a0] sm:$0xff]
    %v373 = vld [vmem:[#allocation5 + $0x8a8] sm:$0xff]
    %v374 = vld [vmem:[#allocation5 + $0x8b0] sm:$0xff]
    %v375 = vld [vmem:[#allocation5 + $0x8b8] sm:$0xff]
    %v376 = vld [vmem:[#allocation5 + $0x8c0] sm:$0xff]
    %v377 = vld [vmem:[#allocation5 + $0x8c8] sm:$0xff]
    %v378 = vld [vmem:[#allocation5 + $0x8d0] sm:$0xff]
    %v379 = vld [vmem:[#allocation5 + $0x8d8] sm:$0xff]
    %v380 = vld [vmem:[#allocation5 + $0x8e0] sm:$0xff]
    %v381 = vld [vmem:[#allocation5 + $0x8e8] sm:$0xff]
    %v382 = vld [vmem:[#allocation5 + $0x8f0] sm:$0xff]
    %v383 = vld [vmem:[#allocation5 + $0x8f8] sm:$0xff]
    %v384 = vld [vmem:[#allocation7] sm:$0x3f]
    %v386 = vperm.slane %v384, 0
    %v387 = vperm.slane %v384, 1
    %v388 = vperm.slane %v384, 2
    %v389 = vperm.slane %v384, 3
    %v390 = vperm.slane %v384, 4
    %v391 = vperm.slane %v384, 5
    %398 = vmatpush.msra.mxu0 %v186
    %399 = vmatpush.msra.mxu0 %v180
    %400 = vmatpush.msra.mxu0 %v174
    %401 = vmatpush.msra.mxu0 %v168
    %402 = vmatpush.msra.mxu0 %v162
    %403 = vmatpush.msra.mxu0 %v156
    %404 = vmatpush.msra.mxu0 %v150
    %405 = vmatpush.msra.mxu0 %v144
    %406 = vmatpush.msra.mxu0 %v138
    %407 = vmatpush.msra.mxu0 %v132
    %408 = vmatpush.msra.mxu0 %v126
    %409 = vmatpush.msra.mxu0 %v120
    %410 = vmatpush.msra.mxu0 %v114
    %411 = vmatpush.msra.mxu0 %v108
    %412 = vmatpush.msra.mxu0 %v102
    %413 = vmatpush.msra.mxu0 %v96
    %414 = vmatmul.f32.gmra.mxu0 %v93
    %v415 = vpop.f32.mrf.mxu0
    %v416 = vadd.f32 %v386, %v415
    %417 = vdwg.mxu0
    %418 = vmatpush.msra.mxu0 %v282
    %419 = vmatpush.msra.mxu0 %v276
    %420 = vmatpush.msra.mxu0 %v270
    %421 = vmatpush.msra.mxu0 %v264
    %422 = vmatpush.msra.mxu0 %v258
    %423 = vmatpush.msra.mxu0 %v252
    %424 = vmatpush.msra.mxu0 %v246
    %425 = vmatpush.msra.mxu0 %v240
    %426 = vmatpush.msra.mxu0 %v234
    %427 = vmatpush.msra.mxu0 %v228
    %428 = vmatpush.msra.mxu0 %v222
    %429 = vmatpush.msra.mxu0 %v216
    %430 = vmatpush.msra.mxu0 %v210
    %431 = vmatpush.msra.mxu0 %v204
    %432 = vmatpush.msra.mxu0 %v198
    %433 = vmatpush.msra.mxu0 %v192
    %434 = vmatmul.f32.gmra.mxu0 %v94
    %v435 = vpop.f32.mrf.mxu0
    %v436 = vadd.f32 %v416, %v435
    %437 = vdwg.mxu0
    %438 = vmatpush.msra.mxu0 %v378
    %439 = vmatpush.msra.mxu0 %v372
    %440 = vmatpush.msra.mxu0 %v366
    %441 = vmatpush.msra.mxu0 %v360
    %442 = vmatpush.msra.mxu0 %v354
    %443 = vmatpush.msra.mxu0 %v348
    %444 = vmatpush.msra.mxu0 %v342
    %445 = vmatpush.msra.mxu0 %v336
    %446 = vmatpush.msra.mxu0 %v330
    %447 = vmatpush.msra.mxu0 %v324
    %448 = vmatpush.msra.mxu0 %v318
    %449 = vmatpush.msra.mxu0 %v312
    %450 = vmatpush.msra.mxu0 %v306
    %451 = vmatpush.msra.mxu0 %v300
    %452 = vmatpush.msra.mxu0 %v294
    %453 = vmatpush.msra.mxu0 %v288
    %454 = vmatmul.f32.gmra.mxu0 %v95
    %v455 = vpop.f32.mrf.mxu0
    %v456 = vadd.f32 %v436, %v455
    %457 = vdwg.mxu0
    %458 = vmatpush.msra.mxu0 %v187
    %459 = vmatpush.msra.mxu0 %v181
    %460 = vmatpush.msra.mxu0 %v175
    %461 = vmatpush.msra.mxu0 %v169
    %462 = vmatpush.msra.mxu0 %v163
    %463 = vmatpush.msra.mxu0 %v157
    %464 = vmatpush.msra.mxu0 %v151
    %465 = vmatpush.msra.mxu0 %v145
    %466 = vmatpush.msra.mxu0 %v139
    %467 = vmatpush.msra.mxu0 %v133
    %468 = vmatpush.msra.mxu0 %v127
    %469 = vmatpush.msra.mxu0 %v121
    %470 = vmatpush.msra.mxu0 %v115
    %471 = vmatpush.msra.mxu0 %v109
    %472 = vmatpush.msra.mxu0 %v103
    %473 = vmatpush.msra.mxu0 %v97
    %474 = vmatmul.f32.gmra.mxu0 %v93
    %v475 = vpop.f32.mrf.mxu0
    %v476 = vadd.f32 %v387, %v475
    %477 = vdwg.mxu0
    %478 = vmatpush.msra.mxu0 %v283
    %479 = vmatpush.msra.mxu0 %v277
    %480 = vmatpush.msra.mxu0 %v271
    %481 = vmatpush.msra.mxu0 %v265
    %482 = vmatpush.msra.mxu0 %v259
    %483 = vmatpush.msra.mxu0 %v253
    %484 = vmatpush.msra.mxu0 %v247
    %485 = vmatpush.msra.mxu0 %v241
    %486 = vmatpush.msra.mxu0 %v235
    %487 = vmatpush.msra.mxu0 %v229
    %488 = vmatpush.msra.mxu0 %v223
    %489 = vmatpush.msra.mxu0 %v217
    %490 = vmatpush.msra.mxu0 %v211
    %491 = vmatpush.msra.mxu0 %v205
    %492 = vmatpush.msra.mxu0 %v199
    %493 = vmatpush.msra.mxu0 %v193
    %494 = vmatmul.f32.gmra.mxu0 %v94
    %v495 = vpop.f32.mrf.mxu0
    %v496 = vadd.f32 %v476, %v495
    %497 = vdwg.mxu0
    %498 = vmatpush.msra.mxu0 %v379
    %499 = vmatpush.msra.mxu0 %v373
    %500 = vmatpush.msra.mxu0 %v367
    %501 = vmatpush.msra.mxu0 %v361
    %502 = vmatpush.msra.mxu0 %v355
    %503 = vmatpush.msra.mxu0 %v349
    %504 = vmatpush.msra.mxu0 %v343
    %505 = vmatpush.msra.mxu0 %v337
    %506 = vmatpush.msra.mxu0 %v331
    %507 = vmatpush.msra.mxu0 %v325
    %508 = vmatpush.msra.mxu0 %v319
    %509 = vmatpush.msra.mxu0 %v313
    %510 = vmatpush.msra.mxu0 %v307
    %511 = vmatpush.msra.mxu0 %v301
    %512 = vmatpush.msra.mxu0 %v295
    %513 = vmatpush.msra.mxu0 %v289
    %514 = vmatmul.f32.gmra.mxu0 %v95
    %v515 = vpop.f32.mrf.mxu0
    %v516 = vadd.f32 %v496, %v515
    %517 = vdwg.mxu0
    %518 = vmatpush.msra.mxu0 %v188
    %519 = vmatpush.msra.mxu0 %v182
    %520 = vmatpush.msra.mxu0 %v176
    %521 = vmatpush.msra.mxu0 %v170
    %522 = vmatpush.msra.mxu0 %v164
    %523 = vmatpush.msra.mxu0 %v158
    %524 = vmatpush.msra.mxu0 %v152
    %525 = vmatpush.msra.mxu0 %v146
    %526 = vmatpush.msra.mxu0 %v140
    %527 = vmatpush.msra.mxu0 %v134
    %528 = vmatpush.msra.mxu0 %v128
    %529 = vmatpush.msra.mxu0 %v122
    %530 = vmatpush.msra.mxu0 %v116
    %531 = vmatpush.msra.mxu0 %v110
    %532 = vmatpush.msra.mxu0 %v104
    %533 = vmatpush.msra.mxu0 %v98
    %534 = vmatmul.f32.gmra.mxu0 %v93
    %v535 = vpop.f32.mrf.mxu0
    %v536 = vadd.f32 %v388, %v535
    %537 = vdwg.mxu0
    %538 = vmatpush.msra.mxu0 %v284
    %539 = vmatpush.msra.mxu0 %v278
    %540 = vmatpush.msra.mxu0 %v272
    %541 = vmatpush.msra.mxu0 %v266
    %542 = vmatpush.msra.mxu0 %v260
    %543 = vmatpush.msra.mxu0 %v254
    %544 = vmatpush.msra.mxu0 %v248
    %545 = vmatpush.msra.mxu0 %v242
    %546 = vmatpush.msra.mxu0 %v236
    %547 = vmatpush.msra.mxu0 %v230
    %548 = vmatpush.msra.mxu0 %v224
    %549 = vmatpush.msra.mxu0 %v218
    %550 = vmatpush.msra.mxu0 %v212
    %551 = vmatpush.msra.mxu0 %v206
    %552 = vmatpush.msra.mxu0 %v200
    %553 = vmatpush.msra.mxu0 %v194
    %554 = vmatmul.f32.gmra.mxu0 %v94
    %v555 = vpop.f32.mrf.mxu0
    %v556 = vadd.f32 %v536, %v555
    %557 = vdwg.mxu0
    %558 = vmatpush.msra.mxu0 %v380
    %559 = vmatpush.msra.mxu0 %v374
    %560 = vmatpush.msra.mxu0 %v368
    %561 = vmatpush.msra.mxu0 %v362
    %562 = vmatpush.msra.mxu0 %v356
    %563 = vmatpush.msra.mxu0 %v350
    %564 = vmatpush.msra.mxu0 %v344
    %565 = vmatpush.msra.mxu0 %v338
    %566 = vmatpush.msra.mxu0 %v332
    %567 = vmatpush.msra.mxu0 %v326
    %568 = vmatpush.msra.mxu0 %v320
    %569 = vmatpush.msra.mxu0 %v314
    %570 = vmatpush.msra.mxu0 %v308
    %571 = vmatpush.msra.mxu0 %v302
    %572 = vmatpush.msra.mxu0 %v296
    %573 = vmatpush.msra.mxu0 %v290
    %574 = vmatmul.f32.gmra.mxu0 %v95
    %v575 = vpop.f32.mrf.mxu0
    %v576 = vadd.f32 %v556, %v575
    %577 = vdwg.mxu0
    %578 = vmatpush.msra.mxu0 %v189
    %579 = vmatpush.msra.mxu0 %v183
    %580 = vmatpush.msra.mxu0 %v177
    %581 = vmatpush.msra.mxu0 %v171
    %582 = vmatpush.msra.mxu0 %v165
    %583 = vmatpush.msra.mxu0 %v159
    %584 = vmatpush.msra.mxu0 %v153
    %585 = vmatpush.msra.mxu0 %v147
    %586 = vmatpush.msra.mxu0 %v141
    %587 = vmatpush.msra.mxu0 %v135
    %588 = vmatpush.msra.mxu0 %v129
    %589 = vmatpush.msra.mxu0 %v123
    %590 = vmatpush.msra.mxu0 %v117
    %591 = vmatpush.msra.mxu0 %v111
    %592 = vmatpush.msra.mxu0 %v105
    %593 = vmatpush.msra.mxu0 %v99
    %594 = vmatmul.f32.gmra.mxu0 %v93
    %v595 = vpop.f32.mrf.mxu0
    %v596 = vadd.f32 %v389, %v595
    %597 = vdwg.mxu0
    %598 = vmatpush.msra.mxu0 %v285
    %599 = vmatpush.msra.mxu0 %v279
    %600 = vmatpush.msra.mxu0 %v273
    %601 = vmatpush.msra.mxu0 %v267
    %602 = vmatpush.msra.mxu0 %v261
    %603 = vmatpush.msra.mxu0 %v255
    %604 = vmatpush.msra.mxu0 %v249
    %605 = vmatpush.msra.mxu0 %v243
    %606 = vmatpush.msra.mxu0 %v237
    %607 = vmatpush.msra.mxu0 %v231
    %608 = vmatpush.msra.mxu0 %v225
    %609 = vmatpush.msra.mxu0 %v219
    %610 = vmatpush.msra.mxu0 %v213
    %611 = vmatpush.msra.mxu0 %v207
    %612 = vmatpush.msra.mxu0 %v201
    %613 = vmatpush.msra.mxu0 %v195
    %614 = vmatmul.f32.gmra.mxu0 %v94
    %v615 = vpop.f32.mrf.mxu0
    %v616 = vadd.f32 %v596, %v615
    %617 = vdwg.mxu0
    %618 = vmatpush.msra.mxu0 %v381
    %619 = vmatpush.msra.mxu0 %v375
    %620 = vmatpush.msra.mxu0 %v369
    %621 = vmatpush.msra.mxu0 %v363
    %622 = vmatpush.msra.mxu0 %v357
    %623 = vmatpush.msra.mxu0 %v351
    %624 = vmatpush.msra.mxu0 %v345
    %625 = vmatpush.msra.mxu0 %v339
    %626 = vmatpush.msra.mxu0 %v333
    %627 = vmatpush.msra.mxu0 %v327
    %628 = vmatpush.msra.mxu0 %v321
    %629 = vmatpush.msra.mxu0 %v315
    %630 = vmatpush.msra.mxu0 %v309
    %631 = vmatpush.msra.mxu0 %v303
    %632 = vmatpush.msra.mxu0 %v297
    %633 = vmatpush.msra.mxu0 %v291
    %634 = vmatmul.f32.gmra.mxu0 %v95
    %v635 = vpop.f32.mrf.mxu0
    %v636 = vadd.f32 %v616, %v635
    %637 = vdwg.mxu0
    %638 = vmatpush.msra.mxu0 %v190
    %639 = vmatpush.msra.mxu0 %v184
    %640 = vmatpush.msra.mxu0 %v178
    %641 = vmatpush.msra.mxu0 %v172
    %642 = vmatpush.msra.mxu0 %v166
    %643 = vmatpush.msra.mxu0 %v160
    %644 = vmatpush.msra.mxu0 %v154
    %645 = vmatpush.msra.mxu0 %v148
    %646 = vmatpush.msra.mxu0 %v142
    %647 = vmatpush.msra.mxu0 %v136
    %648 = vmatpush.msra.mxu0 %v130
    %649 = vmatpush.msra.mxu0 %v124
    %650 = vmatpush.msra.mxu0 %v118
    %651 = vmatpush.msra.mxu0 %v112
    %652 = vmatpush.msra.mxu0 %v106
    %653 = vmatpush.msra.mxu0 %v100
    %654 = vmatmul.f32.gmra.mxu0 %v93
    %v655 = vpop.f32.mrf.mxu0
    %v656 = vadd.f32 %v390, %v655
    %657 = vdwg.mxu0
    %658 = vmatpush.msra.mxu0 %v286
    %659 = vmatpush.msra.mxu0 %v280
    %660 = vmatpush.msra.mxu0 %v274
    %661 = vmatpush.msra.mxu0 %v268
    %662 = vmatpush.msra.mxu0 %v262
    %663 = vmatpush.msra.mxu0 %v256
    %664 = vmatpush.msra.mxu0 %v250
    %665 = vmatpush.msra.mxu0 %v244
    %666 = vmatpush.msra.mxu0 %v238
    %667 = vmatpush.msra.mxu0 %v232
    %668 = vmatpush.msra.mxu0 %v226
    %669 = vmatpush.msra.mxu0 %v220
    %670 = vmatpush.msra.mxu0 %v214
    %671 = vmatpush.msra.mxu0 %v208
    %672 = vmatpush.msra.mxu0 %v202
    %673 = vmatpush.msra.mxu0 %v196
    %674 = vmatmul.f32.gmra.mxu0 %v94
    %v675 = vpop.f32.mrf.mxu0
    %v676 = vadd.f32 %v656, %v675
    %677 = vdwg.mxu0
    %678 = vmatpush.msra.mxu0 %v382
    %679 = vmatpush.msra.mxu0 %v376
    %680 = vmatpush.msra.mxu0 %v370
    %681 = vmatpush.msra.mxu0 %v364
    %682 = vmatpush.msra.mxu0 %v358
    %683 = vmatpush.msra.mxu0 %v352
    %684 = vmatpush.msra.mxu0 %v346
    %685 = vmatpush.msra.mxu0 %v340
    %686 = vmatpush.msra.mxu0 %v334
    %687 = vmatpush.msra.mxu0 %v328
    %688 = vmatpush.msra.mxu0 %v322
    %689 = vmatpush.msra.mxu0 %v316
    %690 = vmatpush.msra.mxu0 %v310
    %691 = vmatpush.msra.mxu0 %v304
    %692 = vmatpush.msra.mxu0 %v298
    %693 = vmatpush.msra.mxu0 %v292
    %694 = vmatmul.f32.gmra.mxu0 %v95
    %v695 = vpop.f32.mrf.mxu0
    %v696 = vadd.f32 %v676, %v695
    %697 = vdwg.mxu0
    %698 = vmatpush.msra.mxu0 %v191
    %699 = vmatpush.msra.mxu0 %v185
    %700 = vmatpush.msra.mxu0 %v179
    %701 = vmatpush.msra.mxu0 %v173
    %702 = vmatpush.msra.mxu0 %v167
    %703 = vmatpush.msra.mxu0 %v161
    %704 = vmatpush.msra.mxu0 %v155
    %705 = vmatpush.msra.mxu0 %v149
    %706 = vmatpush.msra.mxu0 %v143
    %707 = vmatpush.msra.mxu0 %v137
    %708 = vmatpush.msra.mxu0 %v131
    %709 = vmatpush.msra.mxu0 %v125
    %710 = vmatpush.msra.mxu0 %v119
    %711 = vmatpush.msra.mxu0 %v113
    %712 = vmatpush.msra.mxu0 %v107
    %713 = vmatpush.msra.mxu0 %v101
    %714 = vmatmul.f32.gmra.mxu0 %v93
    %v715 = vpop.f32.mrf.mxu0
    %v716 = vadd.f32 %v391, %v715
    %717 = vdwg.mxu0
    %718 = vmatpush.msra.mxu0 %v287
    %719 = vmatpush.msra.mxu0 %v281
    %720 = vmatpush.msra.mxu0 %v275
    %721 = vmatpush.msra.mxu0 %v269
    %722 = vmatpush.msra.mxu0 %v263
    %723 = vmatpush.msra.mxu0 %v257
    %724 = vmatpush.msra.mxu0 %v251
    %725 = vmatpush.msra.mxu0 %v245
    %726 = vmatpush.msra.mxu0 %v239
    %727 = vmatpush.msra.mxu0 %v233
    %728 = vmatpush.msra.mxu0 %v227
    %729 = vmatpush.msra.mxu0 %v221
    %730 = vmatpush.msra.mxu0 %v215
    %731 = vmatpush.msra.mxu0 %v209
    %732 = vmatpush.msra.mxu0 %v203
    %733 = vmatpush.msra.mxu0 %v197
    %734 = vmatmul.f32.gmra.mxu0 %v94
    %v735 = vpop.f32.mrf.mxu0
    %v736 = vadd.f32 %v716, %v735
    %737 = vdwg.mxu0
    %738 = vmatpush.msra.mxu0 %v383
    %739 = vmatpush.msra.mxu0 %v377
    %740 = vmatpush.msra.mxu0 %v371
    %741 = vmatpush.msra.mxu0 %v365
    %742 = vmatpush.msra.mxu0 %v359
    %743 = vmatpush.msra.mxu0 %v353
    %744 = vmatpush.msra.mxu0 %v347
    %745 = vmatpush.msra.mxu0 %v341
    %746 = vmatpush.msra.mxu0 %v335
    %747 = vmatpush.msra.mxu0 %v329
    %748 = vmatpush.msra.mxu0 %v323
    %749 = vmatpush.msra.mxu0 %v317
    %750 = vmatpush.msra.mxu0 %v311
    %751 = vmatpush.msra.mxu0 %v305
    %752 = vmatpush.msra.mxu0 %v299
    %753 = vmatpush.msra.mxu0 %v293
    %754 = vmatmul.f32.gmra.mxu0 %v95
    %v755 = vpop.f32.mrf.mxu0
    %v756 = vadd.f32 %v736, %v755
    %757 = vdwg.mxu0
    %v758 = vmul.f32 %v456, 0.5
    %v759 = vmul.f32 %v516, 0.5
    %v760 = vtanh.pop %v758
    %v761 = vtanh.pop %v759
    %v762 = vadd.f32 %v760, 1.0
    %v763 = vadd.f32 %v761, 1.0
    %v764 = vmul.f32 %v762, 0.5
    %v765 = vmul.f32 %v763, 0.5
    %v766 = vtanh.pop %v576
    %v767 = vtanh.pop %v636
    %v768 = vmul.f32 %v696, 0.5
    %v769 = vmul.f32 %v756, 0.5
    %v770 = vtanh.pop %v768
    %v771 = vtanh.pop %v769
    %v772 = vadd.f32 %v770, 1.0
    %v773 = vadd.f32 %v771, 1.0
    %v774 = vmul.f32 %v772, 0.5
    %v775 = vmul.f32 %v773, 0.5
    %v776 = vsub.f32 %v764, %v774
    %v777 = vsub.f32 %v765, %v775
    %v778 = vmul.f32 %v776, %v766
    %v779 = vmul.f32 %v777, %v767
    %v780 = vld [vmem:[#allocation8] sm:$0xff]
    %v781 = vld [vmem:[#allocation8 + $0x8] sm:$0xff]
    %v782 = vld [vmem:[#allocation8 + $0x10] sm:$0xff]
    %v783 = vld [vmem:[#allocation8 + $0x18] sm:$0xff]
    %v784 = vld [vmem:[#allocation8 + $0x20] sm:$0xff]
    %v785 = vld [vmem:[#allocation8 + $0x28] sm:$0xff]
    %v786 = vld [vmem:[#allocation8 + $0x30] sm:$0xff]
    %v787 = vld [vmem:[#allocation8 + $0x38] sm:$0xff]
    %v788 = vld [vmem:[#allocation8 + $0x40] sm:$0xff]
    %v789 = vld [vmem:[#allocation8 + $0x48] sm:$0xff]
    %v790 = vld [vmem:[#allocation8 + $0x50] sm:$0xff]
    %v791 = vld [vmem:[#allocation8 + $0x58] sm:$0xff]
    %v792 = vld [vmem:[#allocation8 + $0x60] sm:$0xff]
    %v793 = vld [vmem:[#allocation8 + $0x68] sm:$0xff]
    %v794 = vld [vmem:[#allocation8 + $0x70] sm:$0xff]
    %v795 = vld [vmem:[#allocation8 + $0x78] sm:$0xff]
    %v796 = vld [vmem:[#allocation8 + $0x80] sm:$0xff]
    %v797 = vld [vmem:[#allocation8 + $0x88] sm:$0xff]
    %v798 = vld [vmem:[#allocation8 + $0x90] sm:$0xff]
    %v799 = vld [vmem:[#allocation8 + $0x98] sm:$0xff]
    %v800 = vld [vmem:[#allocation8 + $0xa0] sm:$0xff]
    %v801 = vld [vmem:[#allocation8 + $0xa8] sm:$0xff]
    %v802 = vld [vmem:[#allocation8 + $0xb0] sm:$0xff]
    %v803 = vld [vmem:[#allocation8 + $0xb8] sm:$0xff]
    %v804 = vld [vmem:[#allocation8 + $0xc0] sm:$0xff]
    %v805 = vld [vmem:[#allocation8 + $0xc8] sm:$0xff]
    %v806 = vld [vmem:[#allocation8 + $0xd0] sm:$0xff]
    %v807 = vld [vmem:[#allocation8 + $0xd8] sm:$0xff]
    %v808 = vld [vmem:[#allocation8 + $0xe0] sm:$0xff]
    %v809 = vld [vmem:[#allocation8 + $0xe8] sm:$0xff]
    %v810 = vld [vmem:[#allocation8 + $0xf0] sm:$0xff]
    %v811 = vld [vmem:[#allocation8 + $0xf8] sm:$0xff]
    %v812 = vld [vmem:[#allocation10] sm:$0x1]
    %v814 = vperm.slane %v812, 0
    %816 = vmatpush.msra.mxu0 %v795
    %817 = vmatpush.msra.mxu0 %v794
    %818 = vmatpush.msra.mxu0 %v793
    %819 = vmatpush.msra.mxu0 %v792
    %820 = vmatpush.msra.mxu0 %v791
    %821 = vmatpush.msra.mxu0 %v790
    %822 = vmatpush.msra.mxu0 %v789
    %823 = vmatpush.msra.mxu0 %v788
    %824 = vmatpush.msra.mxu0 %v787
    %825 = vmatpush.msra.mxu0 %v786
    %826 = vmatpush.msra.mxu0 %v785
    %827 = vmatpush.msra.mxu0 %v784
    %828 = vmatpush.msra.mxu0 %v783
    %829 = vmatpush.msra.mxu0 %v782
    %830 = vmatpush.msra.mxu0 %v781
    %831 = vmatpush.msra.mxu0 %v780
    %832 = vmatmul.f32.gmra.mxu0 %v778
    %v833 = vpop.f32.mrf.mxu0
    %v834 = vadd.f32 %v814, %v833
    %835 = vdwg.mxu0
    %836 = vmatpush.msra.mxu0 %v811
    %837 = vmatpush.msra.mxu0 %v810
    %838 = vmatpush.msra.mxu0 %v809
    %839 = vmatpush.msra.mxu0 %v808
    %840 = vmatpush.msra.mxu0 %v807
    %841 = vmatpush.msra.mxu0 %v806
    %842 = vmatpush.msra.mxu0 %v805
    %843 = vmatpush.msra.mxu0 %v804
    %844 = vmatpush.msra.mxu0 %v803
    %845 = vmatpush.msra.mxu0 %v802
    %846 = vmatpush.msra.mxu0 %v801
    %847 = vmatpush.msra.mxu0 %v800
    %848 = vmatpush.msra.mxu0 %v799
    %849 = vmatpush.msra.mxu0 %v798
    %850 = vmatpush.msra.mxu0 %v797
    %851 = vmatpush.msra.mxu0 %v796
    %852 = vmatmul.f32.gmra.mxu0 %v779
    %v853 = vpop.f32.mrf.mxu0
    %v854 = vadd.f32 %v834, %v853
    %855 = vdwg.mxu0
    %v856 = vtanh.pop %v854
    %857 = vst [vmem:[#allocation11] sm:$0xff] %v856
    // Predicated region
    $region42: #{tpu_custom_call.1} parent=1 // pred_check
      _
    $region43: #{tpu_custom_call.1} parent=1 // pred_check_branch
      %859 = sbr.rel (0) target = $region45
    $region44: #{tpu_custom_call.1} parent=1 // pred_region
      %861 = vsyncadd [#allocation4], 0
      %s863 = sshll.u32 [#allocation11], 4
      %s864 = int_to_ptr.vmem [resolvable:$true] %s863
      %s865 = sshll.u32 %s5, 4
      %s866 = int_to_ptr.hbm [resolvable:$true] %s865
      %868 = dma.vmem_to_hbm [thread:$0]  %s864, 128, %s866, [#allocation4]
    $region45: #{tpu_custom_call.1} parent=1 // pred_fallthru
      _
    // Predicated region
    $region46: #{tpu_custom_call.1} parent=1 // pred_check
      _
    $region47: #{tpu_custom_call.1} parent=1 // pred_check_branch
      %870 = sbr.rel (0) target = $region49
    $region48: #{tpu_custom_call.1} parent=1 // pred_region
      %872 = dma.done [#allocation4], 128
    $region49: #{tpu_custom_call.1} parent=1 // pred_fallthru
      _
    %873 = vsyncpa [#allocation3], 1
    %874 = vsyncpa [#allocation6], 1
    %875 = vsyncpa [#allocation9], 1
    %876 = vsyncpa [#allocation4], 1

</llo_original>
